<compile_context>
chip_gen: v5e
topology: v5e:2x2
jax: 0.10.0
libtpu: 0.0.40
codegen_flags: <defaults>
</compile_context>

<pallas_src>
import functools

import jax
import jax.numpy as jnp
from jax.experimental import pallas as pl
from jax.experimental.pallas import tpu as pltpu

_SQRT_HALF = 0.7071067811865476


def _round_up(x, m):
    return ((x + m - 1) // m) * m


def _erf(x):
    # Abramowitz & Stegun 7.1.26 (|abs err| <= 1.5e-7), using only
    # abs/where/exp/div which lower on every Mosaic generation.
    a1, a2, a3, a4, a5 = (0.254829592, -0.284496736, 1.421413741,
                          -1.453152027, 1.061405429)
    p = 0.3275911
    ax = jnp.abs(x)
    t = 1.0 / (1.0 + p * ax)
    poly = ((((a5 * t + a4) * t + a3) * t + a2) * t + a1) * t
    y = 1.0 - poly * jnp.exp(-ax * ax)
    return jnp.where(x < 0.0, -y, y)


def _gelu_exact(h):
    # torch.nn.GELU(approximate='none'):  0.5 * h * (1 + erf(h / sqrt(2)))
    return 0.5 * h * (1.0 + _erf(h * _SQRT_HALF))


# ----------------------------------------------------------------------------
# Kernels
# ----------------------------------------------------------------------------
def _ffn_resident_kernel(x_ref, w1_ref, b1_ref, w2_ref, b2_ref, o_ref):
    """Weight-resident path: full w1/w2 live in VMEM, grid = (row tiles,)."""
    h = jnp.dot(x_ref[...], w1_ref[...], preferred_element_type=jnp.float32)
    h = h + b1_ref[...].astype(jnp.float32)
    h = _gelu_exact(h)
    y = jnp.dot(h.astype(w2_ref.dtype), w2_ref[...],
                preferred_element_type=jnp.float32)
    o_ref[...] = (y + b2_ref[...].astype(jnp.float32)).astype(o_ref.dtype)


def _ffn_stream_kernel(x_ref, w1_ref, b1_ref, w2_ref, b2_ref, o_ref, acc_ref):
    """Streaming path: grid = (row tiles, hidden tiles).

    The hidden axis is the trailing "arbitrary" reduction axis; partial
    second-matmul results accumulate in an f32 VMEM scratch and the output is
    written once on the final hidden step.
    """
    h_idx = pl.program_id(1)

    @pl.when(h_idx == 0)
    def _():
        acc_ref[...] = jnp.zeros_like(acc_ref)

    h = jnp.dot(x_ref[...], w1_ref[...], preferred_element_type=jnp.float32)
    h = h + b1_ref[...].astype(jnp.float32)
    h = _gelu_exact(h)
    acc_ref[...] += jnp.dot(h.astype(w2_ref.dtype), w2_ref[...],
                            preferred_element_type=jnp.float32)

    @pl.when(h_idx == pl.num_programs(1) - 1)
    def _():
        o_ref[...] = (acc_ref[...]
                      + b2_ref[...].astype(jnp.float32)).astype(o_ref.dtype)


# ----------------------------------------------------------------------------
# Generation-aware planning
# ----------------------------------------------------------------------------
def _device_plan():
    """Returns (row-tile target, hidden-tile target, vmem limit, two_cores)."""
    kind = ""
    try:
        kind = jax.devices()[0].device_kind.lower()
    except Exception:
        pass
    vmem_cap = None
    try:
        vmem_cap = int(pltpu.get_tpu_info().vmem_capacity_bytes)
    except Exception:
        vmem_cap = None
    is_v7 = "7" in kind
    is_v5e = ("v5e" in kind) or ("v5 lite" in kind) or ("v5lite" in kind)
    if not vmem_cap or vmem_cap <= 0:
        vmem_cap = (64 if is_v7 else 128) * 1024 * 1024
    two_cores = is_v7 or vmem_cap <= 64 * 1024 * 1024
    # Leave headroom below physical VMEM for Mosaic internal scratch.
    vmem_limit = max(32 * 1024 * 1024,
                     min(int(0.85 * vmem_cap), vmem_cap - 8 * 1024 * 1024))
    if is_v5e:
        tm_t, th_t = 256, 512      # v5e ridge ~240 FLOP/B: 256 rows is balanced
    elif two_cores:
        tm_t, th_t = 512, 512      # v7x: 64 MiB/TC VMEM bounds the working set
    else:
        tm_t, th_t = 1024, 1024    # v6e-class: cross the ~640 FLOP/B HBM ridge
    return tm_t, th_t, vmem_limit, two_cores


def _pick_row_tile(M, target, two_cores):
    if M <= target:
        if two_cores and M > 64:
            # Guarantee >=2 row tiles so both v7x TensorCores get work.
            return _round_up(-(-M // 2), 8)
        return M
    return target


def _pick_hidden_tile(H, target):
    if H <= target or H % 128 != 0:
        return H                    # single hidden tile (block == full dim)
    t = (min(target, H) // 128) * 128
    while t >= 128:
        if H % t == 0:
            return t
        t -= 128
    return H


def _stream_vmem_bytes(tm, th, D, cb, ob):
    return (2 * tm * D * cb          # x tile (double-buffered)
            + 2 * D * th * cb        # w1 hidden strip
            + 2 * th * D * cb        # w2 hidden slab
            + 2 * tm * D * ob        # output tile
            + tm * D * 4             # f32 accumulator scratch
            + 2 * (th + D) * 4)      # biases


def _resident_vmem_bytes(tm, D, H, cb, ob):
    return (2 * tm * D * cb          # x tile
            + 2 * 2 * D * H * cb     # w1 + w2 (conservatively double-buffered)
            + 2 * tm * D * ob        # output tile
            + tm * H * (4 + cb)      # f32 hidden intermediate + compute-dtype recast
            + tm * D * 4             # f32 epilogue before the output cast
            + 2 * (H + D) * 4)       # biases


# ----------------------------------------------------------------------------
# Wrapper
# ----------------------------------------------------------------------------
def prepare_ffn_params(w1, b1, w2, b2, compute_dtype=jnp.bfloat16):
    """One-time param prep (call at init, not per forward).

    Casts weights to the MXU compute dtype and zero-pads the hidden dim to a
    lane-aligned multiple of 128.  This hoists the per-call cast/pad HBM
    traffic out of the forward pass.  Padded hidden columns contribute exactly
    zero (b1 pad = 0 -> GELU(0) = 0, and the matching w2 rows are 0).
    """
    D, H = w1.shape
    w1c = jnp.asarray(w1, compute_dtype)
    w2c = jnp.asarray(w2, compute_dtype)
    b1f = jnp.asarray(b1, jnp.float32).reshape(1, H)
    b2f = jnp.asarray(b2, jnp.float32).reshape(1, D)
    if H > 128 and H % 128 != 0:
        Hp = _round_up(H, 128)
        w1c = jnp.pad(w1c, ((0, 0), (0, Hp - H)))
        w2c = jnp.pad(w2c, ((0, Hp - H), (0, 0)))
        b1f = jnp.pad(b1f, ((0, 0), (0, Hp - H)))
    return w1c, b1f, w2c, b2f


@functools.partial(jax.jit, static_argnames=("compute_dtype", "tm", "th", "plan"))
def feed_forward(x, w1, b1, w2, b2, *, compute_dtype=jnp.bfloat16,
                 tm=None, th=None, plan="auto"):
    """x: [B, S, D] -> [B, S, D].  w1: [D, H], b1: [1, H], w2: [H, D], b2: [1, D].

    Pass params through prepare_ffn_params() once so the per-call dtype casts
    below are no-ops.  `plan` in {"auto", "resident", "stream"}.
    """
    B, S, D = x.shape
    H = w1.shape[1]
    M = B * S
    out_dtype = x.dtype
    cb = jnp.dtype(compute_dtype).itemsize
    ob = jnp.dtype(out_dtype).itemsize

    tm_t, th_t, vmem_limit, two_cores = _device_plan()
    budget = int(0.9 * vmem_limit)
    if tm is None:
        tm = _pick_row_tile(M, tm_t, two_cores)
    tm = min(tm, M)

    if plan == "resident":
        resident = True
    elif plan == "stream":
        resident = False
    else:
        resident = _resident_vmem_bytes(tm, D, H, cb, ob) <= budget

    x2 = x.reshape(M, D).astype(compute_dtype)
    # No-ops when params came from prepare_ffn_params() (already compute-dtype).
    w1c = w1.astype(compute_dtype)
    w2c = w2.astype(compute_dtype)
    b1f = b1.reshape(1, H).astype(jnp.float32)
    b2f = b2.reshape(1, D).astype(jnp.float32)

    if resident:
        grid = (pl.cdiv(M, tm),)
        kernel = _ffn_resident_kernel
        in_specs = [
            pl.BlockSpec((tm, D), lambda i: (i, 0)),    # x row tile
            pl.BlockSpec((D, H), lambda i: (0, 0)),     # w1, VMEM-resident
            pl.BlockSpec((1, H), lambda i: (0, 0)),     # b1
            pl.BlockSpec((H, D), lambda i: (0, 0)),     # w2, VMEM-resident
            pl.BlockSpec((1, D), lambda i: (0, 0)),     # b2
        ]
        out_specs = pl.BlockSpec((tm, D), lambda i: (i, 0))
        scratch_shapes = []
        dim_sem = ("parallel",)
        weight_reads = 1
    else:
        if th is None:
            th = _pick_hidden_tile(H, th_t)
        # Shrink tiles until the streaming working set fits the VMEM budget.
        while tm > 128 and _stream_vmem_bytes(tm, th, D, cb, ob) > budget:
            tm = max(128, _round_up(tm // 2, 8))
        while th > 128 and _stream_vmem_bytes(tm, th, D, cb, ob) > budget:
            nt = th - 128
            while nt >= 128 and H % nt != 0:
                nt -= 128
            if nt < 128:
                break
            th = nt
        grid = (pl.cdiv(M, tm), H // th)
        kernel = _ffn_stream_kernel
        in_specs = [
            pl.BlockSpec((tm, D), lambda i, h: (i, 0)),   # x row tile
            pl.BlockSpec((D, th), lambda i, h: (0, h)),   # w1 hidden strip
            pl.BlockSpec((1, th), lambda i, h: (0, h)),   # b1 hidden strip
            pl.BlockSpec((th, D), lambda i, h: (h, 0)),   # w2 hidden slab
            pl.BlockSpec((1, D), lambda i, h: (0, 0)),    # b2
        ]
        out_specs = pl.BlockSpec((tm, D), lambda i, h: (i, 0))
        scratch_shapes = [pltpu.VMEM((tm, D), jnp.float32)]
        dim_sem = ("parallel", "arbitrary")
        weight_reads = -(-M // tm)

    cost = pl.CostEstimate(
        flops=int(4 * M * D * H),
        transcendentals=int(M * H),
        bytes_accessed=int(weight_reads * 2 * D * H * cb
                           + M * D * (cb + ob) + (H + D) * 4),
    )

    out2 = pl.pallas_call(
        kernel,
        out_shape=jax.ShapeDtypeStruct((M, D), out_dtype),
        grid_spec=pltpu.PrefetchScalarGridSpec(
            num_scalar_prefetch=0,
            grid=grid,
            in_specs=in_specs,
            out_specs=out_specs,
            scratch_shapes=scratch_shapes,
        ),
        compiler_params=pltpu.CompilerParams(
            dimension_semantics=dim_sem,
            vmem_limit_bytes=vmem_limit,
        ),
        cost_estimate=cost,
    )(x2, w1c, b1f, w2c, b2f)
    return out2.reshape(B, S, D)


def _xavier_uniform(key, fan_in, fan_out, gain=1.0):
    # Matches torch.nn.init.xavier_uniform_; stored [in, out] for row-major MXU.
    bound = gain * (6.0 / (fan_in + fan_out)) ** 0.5
    return jax.random.uniform(key, (fan_in, fan_out), jnp.float32,
                              minval=-bound, maxval=bound)


if __name__ == "__main__":
    # Small shapes consistent with the module's forward: [batch, seq, dim].
    batch, seq, dim, hidden = 2, 8, 32, 64

    key = jax.random.PRNGKey(0)
    kx, kw1, kw2 = jax.random.split(key, 3)

    x = jax.random.normal(kx, (batch, seq, dim), jnp.float32)
    w1 = _xavier_uniform(kw1, dim, hidden)        # Linear(dim -> hidden)
    b1 = jnp.zeros((1, hidden), jnp.float32)      # bias init = zeros
    w2 = _xavier_uniform(kw2, hidden, dim)        # Linear(hidden -> dim)
    b2 = jnp.zeros((1, dim), jnp.float32)

    # One-time param prep (bf16 cast + hidden padding), hoisted out of forward.
    params = prepare_ffn_params(w1, b1, w2, b2)

    out = jax.block_until_ready(feed_forward(x, *params))
    assert out.shape == x.shape and out.dtype == x.dtype

    def ref_f32(xf, w1, b1, w2, b2):
        h = xf @ w1 + b1[0]
        h = 0.5 * h * (1.0 + jax.lax.erf(h * jnp.float32(_SQRT_HALF)))
        return h @ w2 + b2[0]

    expected = ref_f32(x.reshape(-1, dim), w1, b1, w2, b2).reshape(x.shape)
    err = float(jnp.max(jnp.abs(out - expected)))
    assert jnp.allclose(out, expected, atol=5e-2, rtol=5e-2), err

    # Also exercise the streaming (hidden-tiled + f32 accumulator) path at a
    # small aligned shape by forcing plan="stream".
    b2_, s2_, d2_, h2_ = 2, 64, 128, 256
    kx2, kw3, kw4 = jax.random.split(jax.random.PRNGKey(1), 3)
    x_s = jax.random.normal(kx2, (b2_, s2_, d2_), jnp.float32)
    w1_s = _xavier_uniform(kw3, d2_, h2_)
    b1_s = jnp.zeros((1, h2_), jnp.float32)
    w2_s = _xavier_uniform(kw4, h2_, d2_)
    b2_s = jnp.zeros((1, d2_), jnp.float32)
    params_s = prepare_ffn_params(w1_s, b1_s, w2_s, b2_s)

    out_s = jax.block_until_ready(feed_forward(x_s, *params_s, plan="stream"))
    exp_s = ref_f32(x_s.reshape(-1, d2_), w1_s, b1_s, w2_s, b2_s).reshape(x_s.shape)
    err_s = float(jnp.max(jnp.abs(out_s - exp_s)))
    assert jnp.allclose(out_s, exp_s, atol=5e-2, rtol=5e-2), err_s

    print("KERNEL_OK")
</pallas_src>

<mosaic_0001>
module attributes {stable_mosaic.version = 11 : i64} {
  func.func @_ffn_resident_kernel(%arg0: i32, %arg1: memref<16x32xbf16, #tpu.memory_space<vmem>>, %arg2: memref<32x64xbf16, #tpu.memory_space<vmem>>, %arg3: memref<1x64xf32, #tpu.memory_space<vmem>>, %arg4: memref<64x32xbf16, #tpu.memory_space<vmem>>, %arg5: memref<1x32xf32, #tpu.memory_space<vmem>>, %arg6: memref<16x32xf32, #tpu.memory_space<vmem>>) attributes {dimension_semantics = [#tpu.dimension_semantics<parallel>], iteration_bounds = array<i64: 1>, scalar_prefetch = 0 : i64, scratch_operands = 0 : i64, tpu.core_type = #tpu.core_type<tc>, window_params = [{transform_indices = @transform_0, window_bounds = array<i64: 16, 32>}, {pipeline_mode = #tpu.pipeline_mode<synchronous>, transform_indices = @transform_1, window_bounds = array<i64: 32, 64>}, {pipeline_mode = #tpu.pipeline_mode<synchronous>, transform_indices = @transform_2, window_bounds = array<i64: 1, 64>}, {pipeline_mode = #tpu.pipeline_mode<synchronous>, transform_indices = @transform_3, window_bounds = array<i64: 64, 32>}, {pipeline_mode = #tpu.pipeline_mode<synchronous>, transform_indices = @transform_4, window_bounds = array<i64: 1, 32>}, {transform_indices = @transform_5, window_bounds = array<i64: 16, 32>}]} {
    %c0 = arith.constant 0 : index
    %c0_0 = arith.constant 0 : index
    %0 = vector.load %arg1[%c0, %c0_0] : memref<16x32xbf16, #tpu.memory_space<vmem>>, vector<16x32xbf16>
    %c0_1 = arith.constant 0 : index
    %c0_2 = arith.constant 0 : index
    %1 = vector.load %arg2[%c0_1, %c0_2] : memref<32x64xbf16, #tpu.memory_space<vmem>>, vector<32x64xbf16>
    %cst = arith.constant dense<0.000000e+00> : vector<16x64xf32>
    %2 = tpu.matmul %0, %1, %cst {dimension_numbers = #tpu.dot_dimension_numbers<[1], [0], [0], [1], [0, 0, 1, 1], [], []>} : vector<16x32xbf16>, vector<32x64xbf16>, vector<16x64xf32> -> vector<16x64xf32>
    %c0_3 = arith.constant 0 : index
    %c0_4 = arith.constant 0 : index
    %3 = vector.load %arg3[%c0_3, %c0_4] : memref<1x64xf32, #tpu.memory_space<vmem>>, vector<1x64xf32>
    %4 = vector.broadcast %3 : vector<1x64xf32> to vector<16x64xf32>
    %5 = arith.addf %2, %4 : vector<16x64xf32>
    %cst_5 = arith.constant 5.000000e-01 : f32
    %6 = vector.broadcast %cst_5 : f32 to vector<16x64xf32>
    %7 = arith.mulf %6, %5 : vector<16x64xf32>
    %cst_6 = arith.constant 0.707106769 : f32
    %8 = vector.broadcast %cst_6 : f32 to vector<16x64xf32>
    %9 = arith.mulf %5, %8 : vector<16x64xf32>
    %10 = math.absf %9 : vector<16x64xf32>
    %cst_7 = arith.constant 0.327591091 : f32
    %11 = vector.broadcast %cst_7 : f32 to vector<16x64xf32>
    %12 = arith.mulf %11, %10 : vector<16x64xf32>
    %cst_8 = arith.constant 1.000000e+00 : f32
    %13 = vector.broadcast %cst_8 : f32 to vector<16x64xf32>
    %14 = arith.addf %13, %12 : vector<16x64xf32>
    %cst_9 = arith.constant 1.000000e+00 : f32
    %15 = vector.broadcast %cst_9 : f32 to vector<16x64xf32>
    %16 = arith.divf %15, %14 : vector<16x64xf32>
    %cst_10 = arith.constant 1.06140542 : f32
    %17 = vector.broadcast %cst_10 : f32 to vector<16x64xf32>
    %18 = arith.mulf %17, %16 : vector<16x64xf32>
    %cst_11 = arith.constant -1.45315206 : f32
    %19 = vector.broadcast %cst_11 : f32 to vector<16x64xf32>
    %20 = arith.addf %18, %19 : vector<16x64xf32>
    %21 = arith.mulf %20, %16 : vector<16x64xf32>
    %cst_12 = arith.constant 1.42141378 : f32
    %22 = vector.broadcast %cst_12 : f32 to vector<16x64xf32>
    %23 = arith.addf %21, %22 : vector<16x64xf32>
    %24 = arith.mulf %23, %16 : vector<16x64xf32>
    %cst_13 = arith.constant -0.284496725 : f32
    %25 = vector.broadcast %cst_13 : f32 to vector<16x64xf32>
    %26 = arith.addf %24, %25 : vector<16x64xf32>
    %27 = arith.mulf %26, %16 : vector<16x64xf32>
    %cst_14 = arith.constant 0.254829586 : f32
    %28 = vector.broadcast %cst_14 : f32 to vector<16x64xf32>
    %29 = arith.addf %27, %28 : vector<16x64xf32>
    %30 = arith.mulf %29, %16 : vector<16x64xf32>
    %cst_15 = arith.constant 0.000000e+00 : f32
    %31 = vector.broadcast %cst_15 : f32 to vector<16x64xf32>
    %32 = arith.subf %31, %10 : vector<16x64xf32>
    %33 = arith.mulf %32, %10 : vector<16x64xf32>
    %34 = math.exp %33 : vector<16x64xf32>
    %35 = arith.mulf %30, %34 : vector<16x64xf32>
    %cst_16 = arith.constant 1.000000e+00 : f32
    %36 = vector.broadcast %cst_16 : f32 to vector<16x64xf32>
    %37 = arith.subf %36, %35 : vector<16x64xf32>
    %cst_17 = arith.constant 0.000000e+00 : f32
    %38 = vector.broadcast %cst_17 : f32 to vector<16x64xf32>
    %39 = arith.cmpf olt, %9, %38 : vector<16x64xf32>
    %cst_18 = arith.constant 0.000000e+00 : f32
    %40 = vector.broadcast %cst_18 : f32 to vector<16x64xf32>
    %41 = arith.subf %40, %37 : vector<16x64xf32>
    %42 = arith.select %39, %41, %37 : vector<16x64xi1>, vector<16x64xf32>
    %cst_19 = arith.constant 1.000000e+00 : f32
    %43 = vector.broadcast %cst_19 : f32 to vector<16x64xf32>
    %44 = arith.addf %43, %42 : vector<16x64xf32>
    %45 = arith.mulf %7, %44 : vector<16x64xf32>
    %46 = arith.truncf %45 : vector<16x64xf32> to vector<16x64xbf16>
    %c0_20 = arith.constant 0 : index
    %c0_21 = arith.constant 0 : index
    %47 = vector.load %arg4[%c0_20, %c0_21] : memref<64x32xbf16, #tpu.memory_space<vmem>>, vector<64x32xbf16>
    %cst_22 = arith.constant dense<0.000000e+00> : vector<16x32xf32>
    %48 = tpu.matmul %46, %47, %cst_22 {dimension_numbers = #tpu.dot_dimension_numbers<[1], [0], [0], [1], [0, 0, 1, 1], [], []>} : vector<16x64xbf16>, vector<64x32xbf16>, vector<16x32xf32> -> vector<16x32xf32>
    %c0_23 = arith.constant 0 : index
    %c0_24 = arith.constant 0 : index
    %49 = vector.load %arg5[%c0_23, %c0_24] : memref<1x32xf32, #tpu.memory_space<vmem>>, vector<1x32xf32>
    %50 = vector.broadcast %49 : vector<1x32xf32> to vector<16x32xf32>
    %51 = arith.addf %48, %50 : vector<16x32xf32>
    %c0_25 = arith.constant 0 : index
    %c0_26 = arith.constant 0 : index
    %52 = vector.load %arg6[%c0_25, %c0_26] : memref<16x32xf32, #tpu.memory_space<vmem>>, vector<16x32xf32>
    tpu.vector_store %arg6[%c0_25, %c0_26], %51 {strides = array<i32>} : memref<16x32xf32, #tpu.memory_space<vmem>>, vector<16x32xf32>,
    return
  }
  func.func @transform_0(%arg0: i32) -> (i32, i32) {
    %c0_i32 = arith.constant 0 : i32
    %c0_i32_0 = arith.constant 0 : i32
    return %arg0, %c0_i32 : i32, i32
  }
  func.func @transform_1(%arg0: i32) -> (i32, i32) {
    %c0_i32 = arith.constant 0 : i32
    %c0_i32_0 = arith.constant 0 : i32
    %c0_i32_1 = arith.constant 0 : i32
    return %c0_i32, %c0_i32_0 : i32, i32
  }
  func.func @transform_2(%arg0: i32) -> (i32, i32) {
    %c0_i32 = arith.constant 0 : i32
    %c0_i32_0 = arith.constant 0 : i32
    %c0_i32_1 = arith.constant 0 : i32
    return %c0_i32, %c0_i32_0 : i32, i32
  }
  func.func @transform_3(%arg0: i32) -> (i32, i32) {
    %c0_i32 = arith.constant 0 : i32
    %c0_i32_0 = arith.constant 0 : i32
    %c0_i32_1 = arith.constant 0 : i32
    return %c0_i32, %c0_i32_0 : i32, i32
  }
  func.func @transform_4(%arg0: i32) -> (i32, i32) {
    %c0_i32 = arith.constant 0 : i32
    %c0_i32_0 = arith.constant 0 : i32
    %c0_i32_1 = arith.constant 0 : i32
    return %c0_i32, %c0_i32_0 : i32, i32
  }
  func.func @transform_5(%arg0: i32) -> (i32, i32) {
    %c0_i32 = arith.constant 0 : i32
    %c0_i32_0 = arith.constant 0 : i32
    return %arg0, %c0_i32 : i32, i32
  }
}

</mosaic_0001>

<llo_original>
// kernel: feed_forward.1
$region0: #{feed_forward.1}
  #allocation0 [shape = 'u32[]', space=smem, size = 0x4, offset = 0x4, fixed_abs, tag = 'smem constant byte address 0x4 - core index']
  #allocation1 [shape = 'u32[72,128]{1,0:T(1,128)}', space=vmem, size = 0x9000, scoped, tag = 'internal scratch']
  %s0 = inlined_call_operand.vmem [shape: bf16[16,32], index: 0, kind: input, shape index: {}]
  %s1 = inlined_call_operand.vmem [shape: bf16[32,64], index: 1, kind: input, shape index: {}]
  %s2 = inlined_call_operand.vmem [shape: f32[1,64], index: 2, kind: input, shape index: {}]
  %s3 = inlined_call_operand.vmem [shape: bf16[64,32], index: 3, kind: input, shape index: {}]
  %s4 = inlined_call_operand.vmem [shape: f32[1,32], index: 4, kind: input, shape index: {}]
  %s5 = inlined_call_operand.hbm [shape: f32[16,32], index: 5, kind: output, shape index: {}]
  %s6 = sld [smem:[#allocation0]]
  $region30: #{feed_forward.1} parent=0
    _
  %s8 = ssub.s32 1, %s6
  %s9 = scalar_select 0, %s8, %s6
  $region1: #{feed_forward.1} parent=0
    #allocation2 [shape = 'u8[8192]{0}', space=vmem, size = 0x2000, scoped, tag = 'output window, operand 0, single buffered']
    #allocation3 [shape = 's32[1]{0}', space=sflag, size = 0x4, scoped, tag = 'scoped memory for feed_forward.1']
    %10 = vsyncpa [#allocation3], 0
    // Predicated region
    $region2: #{feed_forward.1} parent=1 // pred_check
      _
    $region3: #{feed_forward.1} parent=1 // pred_check_branch
      %12 = sbr.rel (0) target = $region5
    $region4: #{feed_forward.1} parent=1 // pred_region
      _
    $region5: #{feed_forward.1} parent=1 // pred_fallthru
      _
    // Predicated region
    $region6: #{feed_forward.1} parent=1 // pred_check
      _
    $region7: #{feed_forward.1} parent=1 // pred_check_branch
      %14 = sbr.rel (0) target = $region9
    $region8: #{feed_forward.1} parent=1 // pred_region
      _
    $region9: #{feed_forward.1} parent=1 // pred_fallthru
      _
    // Predicated region
    $region10: #{feed_forward.1} parent=1 // pred_check
      _
    $region11: #{feed_forward.1} parent=1 // pred_check_branch
      %16 = sbr.rel (0) target = $region13
    $region12: #{feed_forward.1} parent=1 // pred_region
      _
    $region13: #{feed_forward.1} parent=1 // pred_fallthru
      _
    // Predicated region
    $region14: #{feed_forward.1} parent=1 // pred_check
      _
    $region15: #{feed_forward.1} parent=1 // pred_check_branch
      %18 = sbr.rel (0) target = $region17
    $region16: #{feed_forward.1} parent=1 // pred_region
      _
    $region17: #{feed_forward.1} parent=1 // pred_fallthru
      _
    // Predicated region
    $region18: #{feed_forward.1} parent=1 // pred_check
      _
    $region19: #{feed_forward.1} parent=1 // pred_check_branch
      %20 = sbr.rel (0) target = $region21
    $region20: #{feed_forward.1} parent=1 // pred_region
      _
    $region21: #{feed_forward.1} parent=1 // pred_fallthru
      _
    %v22 = vld [vmem:[%s0] sm:$0xf]
    %v23 = vld [vmem:[%s0 + $0x4] sm:$0xf]
    %v24 = vld [vmem:[%s1] sm:$0xf]
    %v25 = vld [vmem:[%s1 + $0x4] sm:$0xf]
    %v26 = vld [vmem:[%s1 + $0x8] sm:$0xf]
    %v27 = vld [vmem:[%s1 + $0xc] sm:$0xf]
    %v28 = vld [vmem:[%s2] sm:$0x1]
    %v30 = vperm.slane %v28, 0
    %v34 = vunpack.c.l.b16 %v22
    %v35 = vunpack.c.l.b16 %v23
    %v36 = vpack.c.b16 %v35, %v34
    %v41 = vunpack.c.l.b16 %v24
    %v42 = vunpack.c.l.b16 %v25
    %v43 = vunpack.c.l.b16 %v26
    %v44 = vunpack.c.l.b16 %v27
    %v45 = vpack.c.b16 %v42, %v41
    %v46 = vpack.c.b16 %v44, %v43
    %vm49 = vcmask 261120
    %v51 = vsel %vm49, %v36, 0
    %53 = vmatpush.bf16.msra.mxu0 0
    %54 = vmatpush.bf16.msra.mxu0 0
    %55 = vmatpush.bf16.msra.mxu0 0
    %56 = vmatpush.bf16.msra.mxu0 0
    %57 = vmatpush.bf16.msra.mxu0 0
    %58 = vmatpush.bf16.msra.mxu0 0
    %59 = vmatpush.bf16.msra.mxu0 %v46
    %60 = vmatpush.bf16.msra.mxu0 %v45
    %61 = vmatmul.bf16.gmra.mxu0 %v51
    %v62 = vpop.f32.mrf.mxu0
    %v63 = vadd.f32 %v30, %v62
    %v64 = vpop.f32.mrf.mxu0
    %v65 = vadd.f32 %v30, %v64
    %66 = vdwg.mxu0
    %v67 = vmul.f32 %v63, 0.5
    %v68 = vmul.f32 %v65, 0.5
    %v69 = vmul.f32 %v63, 0.70710677
    %v70 = vmul.f32 %v65, 0.70710677
    %v71 = vand.u32 2147483647, %v69
    %v72 = vand.u32 2147483647, %v70
    %v73 = vmul.f32 %v71, 0.3275911
    %v74 = vmul.f32 %v72, 0.3275911
    %v75 = vadd.f32 %v73, 1.0
    %v76 = vadd.f32 %v74, 1.0
    %v77 = vrcp.pop %v75
    %v78 = vmul.f32 %v75, %v77
    %v79 = vsub.f32 1.0, %v78
    %v80 = vmul.f32 %v77, %v79
    %v81 = vadd.f32 %v77, %v80
    %vm82 = vweird.f32 %v75
    %vm83 = vweird.f32 %v77
    %vm84 = vmor %vm82, %vm83
    %v85 = vsel %vm84, %v77, %v81
    %v86 = vand.u32 2147483647, %v75
    %vm87 = vcmp.eq.f32.partialorder %v86, 8.507059e+37
    %v88 = vand.u32 %v75, 2147483648
    %v89 = vor.u32 1.1754944e-38, %v88
    %v90 = vsel %vm87, %v89, %v85
    %v91 = vmul.f32 1.0, %v90
    %v92 = vrcp.pop %v76
    %v93 = vmul.f32 %v76, %v92
    %v94 = vsub.f32 1.0, %v93
    %v95 = vmul.f32 %v92, %v94
    %v96 = vadd.f32 %v92, %v95
    %vm97 = vweird.f32 %v76
    %vm98 = vweird.f32 %v92
    %vm99 = vmor %vm97, %vm98
    %v100 = vsel %vm99, %v92, %v96
    %v101 = vand.u32 2147483647, %v76
    %vm102 = vcmp.eq.f32.partialorder %v101, 8.507059e+37
    %v103 = vand.u32 %v76, 2147483648
    %v104 = vor.u32 1.1754944e-38, %v103
    %v105 = vsel %vm102, %v104, %v100
    %v106 = vmul.f32 1.0, %v105
    %v107 = vmul.f32 %v91, 1.0614054
    %v108 = vmul.f32 %v106, 1.0614054
    %v109 = vadd.f32 %v107, -1.4531521
    %v110 = vadd.f32 %v108, -1.4531521
    %v111 = vmul.f32 %v109, %v91
    %v112 = vmul.f32 %v110, %v106
    %v113 = vadd.f32 %v111, 1.4214138
    %v114 = vadd.f32 %v112, 1.4214138
    %v115 = vmul.f32 %v113, %v91
    %v116 = vmul.f32 %v114, %v106
    %v117 = vadd.f32 %v115, -0.28449672
    %v118 = vadd.f32 %v116, -0.28449672
    %v119 = vmul.f32 %v117, %v91
    %v120 = vmul.f32 %v118, %v106
    %v121 = vadd.f32 %v119, 0.2548296
    %v122 = vadd.f32 %v120, 0.2548296
    %v123 = vmul.f32 %v121, %v91
    %v124 = vmul.f32 %v122, %v106
    %v125 = vsub.f32 0.0, %v71
    %v126 = vsub.f32 0.0, %v72
    %v127 = vmul.f32 %v125, %v71
    %v128 = vmul.f32 %v126, %v72
    %v129 = vmul.f32 %v127, 1.442695
    %v130 = vpow.pop %v129
    %v131 = vmul.f32 %v128, 1.442695
    %v132 = vpow.pop %v131
    %v133 = vmul.f32 %v123, %v130
    %v134 = vmul.f32 %v124, %v132
    %v135 = vsub.f32 1.0, %v133
    %v136 = vsub.f32 1.0, %v134
    %vm137 = vcmp.lt.f32.partialorder %v69, 0.0
    %vm138 = vcmp.lt.f32.partialorder %v70, 0.0
    %v139 = vsub.f32 0.0, %v135
    %v140 = vsub.f32 0.0, %v136
    %v141 = vsel %vm137, %v139, %v135
    %v142 = vsel %vm138, %v140, %v136
    %v143 = vadd.f32 %v141, 1.0
    %v144 = vadd.f32 %v142, 1.0
    %v145 = vmul.f32 %v67, %v143
    %v146 = vmul.f32 %v68, %v144
    %v147 = vpack.c.bf16 %v146, %v145
    %v148 = vld [vmem:[%s3] sm:$0xf]
    %v149 = vld [vmem:[%s3 + $0x4] sm:$0xf]
    %v150 = vld [vmem:[%s3 + $0x8] sm:$0xf]
    %v151 = vld [vmem:[%s3 + $0xc] sm:$0xf]
    %v152 = vld [vmem:[%s3 + $0x10] sm:$0xf]
    %v153 = vld [vmem:[%s3 + $0x14] sm:$0xf]
    %v154 = vld [vmem:[%s3 + $0x18] sm:$0xf]
    %v155 = vld [vmem:[%s3 + $0x1c] sm:$0xf]
    %v156 = vld [vmem:[%s4] sm:$0x1]
    %v158 = vperm.slane %v156, 0
    %v168 = vunpack.c.l.b16 %v148
    %v169 = vunpack.c.l.b16 %v149
    %v170 = vunpack.c.l.b16 %v150
    %v171 = vunpack.c.l.b16 %v151
    %v172 = vunpack.c.l.b16 %v152
    %v173 = vunpack.c.l.b16 %v153
    %v174 = vunpack.c.l.b16 %v154
    %v175 = vunpack.c.l.b16 %v155
    %v176 = vpack.c.b16 %v169, %v168
    %v177 = vpack.c.b16 %v171, %v170
    %v178 = vpack.c.b16 %v173, %v172
    %v179 = vpack.c.b16 %v175, %v174
    %vm184 = vcmask 523264
    %v186 = vsel %vm184, %v147, 0
    %188 = vmatpush.bf16.msra.mxu0 0
    %189 = vmatpush.bf16.msra.mxu0 0
    %190 = vmatpush.bf16.msra.mxu0 0
    %191 = vmatpush.bf16.msra.mxu0 0
    %192 = vmatpush.bf16.msra.mxu0 %v179
    %193 = vmatpush.bf16.msra.mxu0 %v178
    %194 = vmatpush.bf16.msra.mxu0 %v177
    %195 = vmatpush.bf16.msra.mxu0 %v176
    %196 = vmatmul.bf16.gmra.mxu0 %v186
    %v197 = vpop.f32.mrf.mxu0
    %v198 = vadd.f32 %v158, %v197
    %v199 = vpop.f32.mrf.mxu0
    %v200 = vadd.f32 %v158, %v199
    %201 = vdwg.mxu0
    %202 = vst.msk [vmem:[#allocation2] sm:$0xff] %vm49, %v198
    %203 = vst.msk [vmem:[#allocation2 + $0x8] sm:$0xff] %vm49, %v200
    // Predicated region
    $region22: #{feed_forward.1} parent=1 // pred_check
      _
    $region23: #{feed_forward.1} parent=1 // pred_check_branch
      %205 = sbr.rel (0) target = $region25
    $region24: #{feed_forward.1} parent=1 // pred_region
      %207 = vsyncadd [#allocation3], 0
      %s208 = sshll.u32 [#allocation2], 4
      %s209 = int_to_ptr.vmem [resolvable:$true] %s208
      %s210 = sshll.u32 %s5, 4
      %s211 = int_to_ptr.hbm [resolvable:$true] %s210
      %216 = dma.vmem_to_hbm [thread:$0]  %s209, 256, %s211, [#allocation3], 128, 128, 8
    $region25: #{feed_forward.1} parent=1 // pred_fallthru
      _
    // Predicated region
    $region26: #{feed_forward.1} parent=1 // pred_check
      _
    $region27: #{feed_forward.1} parent=1 // pred_check_branch
      %218 = sbr.rel (0) target = $region29
    $region28: #{feed_forward.1} parent=1 // pred_region
      %220 = dma.done [#allocation3], 256
    $region29: #{feed_forward.1} parent=1 // pred_fallthru
      _
    %221 = vsyncpa [#allocation3], 1

</llo_original>
